<compile_context>
chip_gen: v7x
topology: tpu7x:2x2x1
jax: 0.10.0
libtpu: 0.0.40
codegen_flags: <defaults>
</compile_context>

<pallas_src>
import functools

import jax
import jax.numpy as jnp
from jax.experimental import pallas as pl
from jax.experimental.pallas import tpu as pltpu


# --------------------------------------------------------------------------
# helpers
# --------------------------------------------------------------------------

def _round_up(x, m):
    return -(-x // m) * m


def _tile_and_pad(dim, target, align):
    """Tile size (multiple of `align`, <= target) plus the padded dim it divides."""
    t = min(target, _round_up(dim, align))
    t = max(align, (t // align) * align)
    return t, _round_up(dim, t)


# --------------------------------------------------------------------------
# forward: y = x @ W^T + b    (weight stored pre-transposed as W^T = [Din, Dout])
# --------------------------------------------------------------------------

def _linear_kernel(x_ref, wt_ref, b_ref, o_ref, acc_ref):
    # Fold the bias into the accumulator init (no epilogue add / broadcast).
    @pl.when(pl.program_id(2) == 0)
    def _():
        acc_ref[...] = jnp.broadcast_to(b_ref[...].astype(jnp.float32),
                                        acc_ref.shape)

    # Pre-transposed weight -> plain [tm,tk]@[tk,tn] MXU matmul, f32 accumulate.
    acc_ref[...] += jnp.dot(x_ref[...], wt_ref[...],
                            preferred_element_type=jnp.float32)

    @pl.when(pl.program_id(2) == pl.num_programs(2) - 1)
    def _():
        o_ref[...] = acc_ref[...].astype(o_ref.dtype)


_MIN_PALLAS_DIM = 128   # below one lane tile, launch overhead beats the kernel


@functools.partial(jax.jit, static_argnames=("compute_dtype",))
def _linear_forward(x, w_t, b, compute_dtype=None):
    B, Din = x.shape
    Dout = w_t.shape[1]

    # Tiny layers: masked partial tiles + fixed launch cost lose to stock XLA.
    if Din < _MIN_PALLAS_DIM or Dout < _MIN_PALLAS_DIM:
        return (x @ w_t + b[None, :]).astype(x.dtype)

    xm = x if compute_dtype is None else x.astype(compute_dtype)
    wm = w_t if compute_dtype is None else w_t.astype(compute_dtype)

    tm, Bp = _tile_and_pad(B, 256, 8)
    tn, Np = _tile_and_pad(Dout, 512, 128)   # larger N tile: more weight reuse
    tk, Kp = _tile_and_pad(Din, 512, 128)

    # Zero-pad ragged dims to the bounded tiles (zeros add nothing to the dot);
    # tiles never fall back to a full dimension -> safe on v7x's smaller VMEM.
    if (Bp, Kp) != (B, Din):
        xm = jnp.pad(xm, ((0, Bp - B), (0, Kp - Din)))
    if (Kp, Np) != (Din, Dout):
        wm = jnp.pad(wm, ((0, Kp - Din), (0, Np - Dout)))
    b2 = jnp.pad(b, (0, Np - Dout)).reshape(1, Np)

    in_bytes = xm.dtype.itemsize
    vmem_est = (2 * (tm * tk + tk * tn) * in_bytes   # double-buffered inputs
                + 2 * tn * 4                         # bias
                + 2 * tm * tn * x.dtype.itemsize     # double-buffered output
                + tm * tn * 4)                       # accumulator
    out = pl.pallas_call(
        _linear_kernel,
        out_shape=jax.ShapeDtypeStruct((Bp, Np), x.dtype),
        grid=(Bp // tm, Np // tn, Kp // tk),
        in_specs=[
            pl.BlockSpec((tm, tk), lambda i, j, k: (i, k)),   # x
            pl.BlockSpec((tk, tn), lambda i, j, k: (k, j)),   # W^T
            pl.BlockSpec((1, tn), lambda i, j, k: (0, j)),    # bias
        ],
        out_specs=pl.BlockSpec((tm, tn), lambda i, j, k: (i, j)),
        scratch_shapes=[pltpu.VMEM((tm, tn), jnp.float32)],
        compiler_params=pltpu.CompilerParams(
            dimension_semantics=("parallel", "parallel", "arbitrary"),
            vmem_limit_bytes=int(min(48 << 20, max(16 << 20, 2 * vmem_est)))),
    )(xm, wm, b2)
    return out[:B, :Dout]


# --------------------------------------------------------------------------
# EMA update:  p_ema <- p_new + mu * (p_ema - p_new)   (== mu*ema + (1-mu)*new)
# --------------------------------------------------------------------------

def _ema_blend(mu, p_ema, p_new):
    pe = p_ema.astype(jnp.float32)
    pn = p_new.astype(jnp.float32)     # new params cast once, here (no pre-round)
    return pn + mu * (pe - pn)         # 1 mul + 2 add/sub, pure VPU


def _ema_tiled_kernel(mu_ref, ema_ref, new_ref, out_ref):
    out_ref[...] = _ema_blend(mu_ref[0], ema_ref[...], new_ref[...])


def _make_ema_fused_kernel(n):
    def kernel(mu_ref, *refs):
        mu = mu_ref[0]
        for e_ref, n_ref, o_ref in zip(refs[:n], refs[n:2 * n], refs[2 * n:]):
            o_ref[...] = _ema_blend(mu, e_ref[...], n_ref[...])
    return kernel


_EMA_TARGET_BLOCK_BYTES = 1 << 20   # ~1 MiB f32 per operand block: long DMAs, and
                                    # 3 operands x 2 buffers ~ 6 MiB fits every
                                    # chip's scoped-VMEM default (incl. v7x)
_EMA_LARGE_PARAM_BYTES = 1 << 20    # params >= 1 MiB get their own tiled call


def _ema_update_tiled(mu_arr, ema2d, new2d):
    """Row-tiled, in-place EMA blend for one large lane-dense [rows, cols] param."""
    rows, cols = ema2d.shape
    target_rows = max(8, (_EMA_TARGET_BLOCK_BYTES // (4 * cols)) // 8 * 8)
    tr = min(rows, target_rows)
    while tr > 8 and rows % tr:
        tr -= 8
    if rows % tr:
        tr = rows
    # Keep >= 2 grid steps so both v7x TensorCores get work and in/out DMAs
    # overlap (v5e/v6e: pipelining only).
    if rows // tr < 2 and rows % 16 == 0:
        tr = rows // 2
    return pl.pallas_call(
        _ema_tiled_kernel,
        out_shape=jax.ShapeDtypeStruct((rows, cols), jnp.float32),
        grid=(rows // tr,),
        in_specs=[
            pl.BlockSpec(memory_space=pltpu.MemorySpace.SMEM),   # mu scalar
            pl.BlockSpec((tr, cols), lambda i: (i, 0)),          # f32 EMA master
            pl.BlockSpec((tr, cols), lambda i: (i, 0)),          # new params
        ],
        out_specs=pl.BlockSpec((tr, cols), lambda i: (i, 0)),
        input_output_aliases={1: 0},                             # true in-place
        compiler_params=pltpu.CompilerParams(
            dimension_semantics=("parallel",)),
    )(mu_arr, ema2d, new2d)


def _ema_update_fused(mu_arr, ema_views, new_views):
    """One full-block pallas_call blending all remaining (small) params at once."""
    n = len(ema_views)
    outs = pl.pallas_call(
        _make_ema_fused_kernel(n),
        out_shape=tuple(jax.ShapeDtypeStruct(v.shape, jnp.float32)
                        for v in ema_views),
        in_specs=([pl.BlockSpec(memory_space=pltpu.MemorySpace.SMEM)]
                  + [pl.BlockSpec(memory_space=pltpu.MemorySpace.VMEM)] * (2 * n)),
        out_specs=tuple(pl.BlockSpec(memory_space=pltpu.MemorySpace.VMEM)
                        for _ in range(n)),
        input_output_aliases={1 + i: i for i in range(n)},       # true in-place
    )(mu_arr, *ema_views, *new_views)
    return list(outs) if isinstance(outs, (list, tuple)) else [outs]


def _as_2d(p):
    return p.reshape(-1, p.shape[-1]) if p.ndim >= 2 else p.reshape(1, -1)


def _ema_update_params(ema_params, new_params, mu_arr):
    """Blend matching tuples of params; returns tuple of f32 arrays (same shapes).

    No concat/pad/slice: only free reshapes to lane-dense 2-D views per param.
    """
    results = [None] * len(ema_params)
    small_idx, small_ema, small_new = [], [], []
    for i, (e, p) in enumerate(zip(ema_params, new_params)):
        e2, p2 = _as_2d(e), _as_2d(p)
        rows, cols = e2.shape
        if (e.size * 4 >= _EMA_LARGE_PARAM_BYTES
                and rows % 8 == 0 and cols % 128 == 0):
            results[i] = _ema_update_tiled(mu_arr, e2, p2).reshape(e.shape)
        else:
            small_idx.append(i)
            small_ema.append(e2)
            small_new.append(p2)
    if small_idx:
        outs = _ema_update_fused(mu_arr, small_ema, small_new)
        for i, o in zip(small_idx, outs):
            results[i] = o.reshape(ema_params[i].shape)
    return tuple(results)


@functools.partial(jax.jit, donate_argnums=(0,))
def _ema_update_linear(ema_params, new_params_pt, mu_arr):
    """ema_params = (W^T [Din,Dout] f32, b [Dout] f32); new params in PyTorch layout."""
    w_t_ema, b_ema = ema_params
    w_new, b_new = new_params_pt
    w_new_t = jnp.transpose(w_new)     # one pass over the NEW weight only
    return _ema_update_params((w_t_ema, b_ema), (w_new_t, b_new), mu_arr)


# --------------------------------------------------------------------------
# module-like wrapper
# --------------------------------------------------------------------------

class ExponentialMovingAverage:
    """JAX/Pallas port of sample_factory ExponentialMovingAverage around a Linear.

    API uses PyTorch convention (weight [out, in], bias [out]); internally the
    EMA keeps f32 master copies (weight pre-transposed to [in, out]) so forward
    never relayouts and low-precision params never swallow (1-mu) increments.
    """

    # TODO(synk): torch.nn.parallel.DataParallel has no Pallas equivalent;
    # forward runs the wrapped module directly (identical math on one device).

    def __init__(self, init_params, mu, data_parallel=False):
        self.mu = float(mu)
        self.data_parallel = data_parallel
        self._params = self._to_internal(init_params)

    @staticmethod
    def _to_internal(params):
        return {
            "weight_t": jnp.array(params["weight"], jnp.float32).T,  # copy + 1x T
            "bias": jnp.array(params["bias"], jnp.float32),
        }

    @property
    def params(self):
        # Expose the EMA state back in PyTorch convention.
        return {"weight": self._params["weight_t"].T, "bias": self._params["bias"]}

    def forward(self, x, compute_dtype=None):
        return _linear_forward(x, self._params["weight_t"], self._params["bias"],
                               compute_dtype=compute_dtype)

    __call__ = forward

    def update(self, new_params, step=None):
        if step is None:
            mu = self.mu
        else:
            mu = min(self.mu, (1.0 + step) / (10.0 + step))
        if step is not None and step < 0:
            # clone/detach path
            self._params = self._to_internal(new_params)
            return
        mu_arr = jnp.full((1,), mu, dtype=jnp.float32)
        w_t, b = _ema_update_linear(
            (self._params["weight_t"], self._params["bias"]),
            (jnp.asarray(new_params["weight"]), jnp.asarray(new_params["bias"])),
            mu_arr)
        self._params = {"weight_t": w_t, "bias": b}


# --------------------------------------------------------------------------
# demo / self-test
# --------------------------------------------------------------------------

if __name__ == "__main__":
    key = jax.random.PRNGKey(0)
    k_x, k_w, k_b, k_w2, k_b2 = jax.random.split(key, 5)

    batch, hidden = 64, 512
    x = jax.random.normal(k_x, (batch, hidden), dtype=jnp.float32)

    # Deterministic "init_module" parameters (PyTorch Linear convention).
    w = jax.random.normal(k_w, (hidden, hidden), dtype=jnp.float32) * 0.05
    b = jax.random.normal(k_b, (hidden,), dtype=jnp.float32) * 0.05
    ema = ExponentialMovingAverage({"weight": w, "bias": b}, mu=0.999)

    # Forward through the wrapped module (tiled Pallas MXU matmul).
    y = jax.block_until_ready(ema(x))
    y_ref = x @ w.T + b[None, :]
    assert y.shape == (batch, hidden)
    assert jnp.allclose(y, y_ref, atol=5e-2, rtol=1e-2), "forward mismatch"

    # EMA update against a "new" module's parameters (in-place Pallas blend).
    w_new = jax.random.normal(k_w2, (hidden, hidden), dtype=jnp.float32) * 0.05
    b_new = jax.random.normal(k_b2, (hidden,), dtype=jnp.float32) * 0.05
    step = 5
    ema.update({"weight": w_new, "bias": b_new}, step=step)
    p1 = ema.params
    jax.block_until_ready(p1["weight"])

    mu_eff = min(0.999, (1.0 + step) / (10.0 + step))
    w_ref = mu_eff * w + (1.0 - mu_eff) * w_new
    b_ref = mu_eff * b + (1.0 - mu_eff) * b_new
    assert jnp.allclose(p1["weight"], w_ref, atol=1e-5, rtol=1e-5), "ema weight mismatch"
    assert jnp.allclose(p1["bias"], b_ref, atol=1e-5, rtol=1e-5), "ema bias mismatch"

    # Second update with step=None (mu = self.mu path).
    ema.update({"weight": w, "bias": b}, step=None)
    p2 = ema.params
    jax.block_until_ready(p2["weight"])
    w_ref2 = 0.999 * w_ref + 0.001 * w
    b_ref2 = 0.999 * b_ref + 0.001 * b
    assert jnp.allclose(p2["weight"], w_ref2, atol=1e-5, rtol=1e-5), "ema weight mismatch (2)"
    assert jnp.allclose(p2["bias"], b_ref2, atol=1e-5, rtol=1e-5), "ema bias mismatch (2)"

    print("KERNEL_OK")
</pallas_src>

<mosaic_0001>
module attributes {stable_mosaic.version = 11 : i64} {
  func.func @_linear_kernel(%arg0: i32, %arg1: i32, %arg2: i32, %arg3: memref<64x512xf32, #tpu.memory_space<vmem>>, %arg4: memref<512x512xf32, #tpu.memory_space<vmem>>, %arg5: memref<1x512xf32, #tpu.memory_space<vmem>>, %arg6: memref<64x512xf32, #tpu.memory_space<vmem>>, %arg7: memref<64x512xf32, #tpu.memory_space<vmem>>) attributes {dimension_semantics = [#tpu.dimension_semantics<parallel>, #tpu.dimension_semantics<parallel>, #tpu.dimension_semantics<arbitrary>], iteration_bounds = array<i64: 1, 1, 1>, scalar_prefetch = 0 : i64, scratch_operands = 1 : i64, tpu.core_type = #tpu.core_type<tc>, window_params = [{transform_indices = @transform_0, window_bounds = array<i64: 64, 512>}, {transform_indices = @transform_1, window_bounds = array<i64: 512, 512>}, {transform_indices = @transform_2, window_bounds = array<i64: 1, 512>}, {transform_indices = @transform_3, window_bounds = array<i64: 64, 512>}]} {
    %c0_i32 = arith.constant 0 : i32
    %0 = arith.cmpi eq, %arg2, %c0_i32 : i32
    %1 = arith.extui %0 : i1 to i32
    %c0_i32_0 = arith.constant 0 : i32
    %2 = arith.cmpi ne, %1, %c0_i32_0 : i32
    scf.if %2 {
      %c0_10 = arith.constant 0 : index
      %c0_11 = arith.constant 0 : index
      %12 = vector.load %arg5[%c0_10, %c0_11] : memref<1x512xf32, #tpu.memory_space<vmem>>, vector<1x512xf32>
      %13 = vector.shape_cast %12 : vector<1x512xf32> to vector<1x512xf32>
      %14 = vector.broadcast %13 : vector<1x512xf32> to vector<64x512xf32>
      %c0_12 = arith.constant 0 : index
      %c0_13 = arith.constant 0 : index
      %15 = vector.load %arg7[%c0_12, %c0_13] : memref<64x512xf32, #tpu.memory_space<vmem>>, vector<64x512xf32>
      tpu.vector_store %arg7[%c0_12, %c0_13], %14 {strides = array<i32>} : memref<64x512xf32, #tpu.memory_space<vmem>>, vector<64x512xf32>,
    } else {
    }
    %c0 = arith.constant 0 : index
    %c0_1 = arith.constant 0 : index
    %3 = vector.load %arg7[%c0, %c0_1] : memref<64x512xf32, #tpu.memory_space<vmem>>, vector<64x512xf32>
    %c0_2 = arith.constant 0 : index
    %c0_3 = arith.constant 0 : index
    %4 = vector.load %arg3[%c0_2, %c0_3] : memref<64x512xf32, #tpu.memory_space<vmem>>, vector<64x512xf32>
    %c0_4 = arith.constant 0 : index
    %c0_5 = arith.constant 0 : index
    %5 = vector.load %arg4[%c0_4, %c0_5] : memref<512x512xf32, #tpu.memory_space<vmem>>, vector<512x512xf32>
    %cst = arith.constant dense<0.000000e+00> : vector<64x512xf32>
    %6 = tpu.matmul %4, %5, %cst {dimension_numbers = #tpu.dot_dimension_numbers<[1], [0], [0], [1], [0, 0, 1, 1], [], []>} : vector<64x512xf32>, vector<512x512xf32>, vector<64x512xf32> -> vector<64x512xf32>
    %7 = arith.addf %3, %6 : vector<64x512xf32>
    %c0_6 = arith.constant 0 : index
    %c0_7 = arith.constant 0 : index
    %8 = vector.load %arg7[%c0_6, %c0_7] : memref<64x512xf32, #tpu.memory_space<vmem>>, vector<64x512xf32>
    tpu.vector_store %arg7[%c0_6, %c0_7], %7 {strides = array<i32>} : memref<64x512xf32, #tpu.memory_space<vmem>>, vector<64x512xf32>,
    %c0_i32_8 = arith.constant 0 : i32
    %9 = arith.cmpi eq, %arg2, %c0_i32_8 : i32
    %10 = arith.extui %9 : i1 to i32
    %c0_i32_9 = arith.constant 0 : i32
    %11 = arith.cmpi ne, %10, %c0_i32_9 : i32
    scf.if %11 {
      %c0_10 = arith.constant 0 : index
      %c0_11 = arith.constant 0 : index
      %12 = vector.load %arg7[%c0_10, %c0_11] : memref<64x512xf32, #tpu.memory_space<vmem>>, vector<64x512xf32>
      %c0_12 = arith.constant 0 : index
      %c0_13 = arith.constant 0 : index
      %13 = vector.load %arg6[%c0_12, %c0_13] : memref<64x512xf32, #tpu.memory_space<vmem>>, vector<64x512xf32>
      tpu.vector_store %arg6[%c0_12, %c0_13], %12 {strides = array<i32>} : memref<64x512xf32, #tpu.memory_space<vmem>>, vector<64x512xf32>,
    } else {
    }
    return
  }
  func.func @transform_0(%arg0: i32, %arg1: i32, %arg2: i32) -> (i32, i32) {
    %c0_i32 = arith.constant 0 : i32
    return %arg0, %arg2 : i32, i32
  }
  func.func @transform_1(%arg0: i32, %arg1: i32, %arg2: i32) -> (i32, i32) {
    %c0_i32 = arith.constant 0 : i32
    return %arg2, %arg1 : i32, i32
  }
  func.func @transform_2(%arg0: i32, %arg1: i32, %arg2: i32) -> (i32, i32) {
    %c0_i32 = arith.constant 0 : i32
    %c0_i32_0 = arith.constant 0 : i32
    return %c0_i32, %arg1 : i32, i32
  }
  func.func @transform_3(%arg0: i32, %arg1: i32, %arg2: i32) -> (i32, i32) {
    %c0_i32 = arith.constant 0 : i32
    return %arg0, %arg1 : i32, i32
  }
}

</mosaic_0001>

<llo_original>
// kernel: _linear_forward.1
$region0: #{_linear_forward.1}
  #allocation0 [shape = 'u32[]', space=smem, size = 0x4, offset = 0x4, fixed_abs, tag = 'smem constant byte address 0x4 - core index']
  #allocation1 [shape = 'u32[144,128]{1,0:T(1,128)}', space=vmem, size = 0x12000, scoped, tag = 'internal scratch']
  #allocation2 [shape = 'f32[64,512]{1,0:T(8,128)}', space=vmem, size = 0x20000, scoped, tag = 'scratch operand']
  %s0 = inlined_call_operand.hbm [shape: f32[64,512], index: 0, kind: input, shape index: {}]
  %s1 = inlined_call_operand.hbm [shape: f32[512,512], index: 1, kind: input, shape index: {}]
  %s2 = inlined_call_operand.vmem [shape: f32[1,512], index: 2, kind: input, shape index: {}]
  %s3 = inlined_call_operand.hbm [shape: f32[64,512], index: 3, kind: output, shape index: {}]
  %s4 = sld [smem:[#allocation0]]
  $region38: #{_linear_forward.1} parent=0
    _
  %s6 = ssub.s32 1, %s4
  %s7 = scalar_select 0, %s6, %s4
  $region1: #{_linear_forward.1} parent=0
    #allocation3 [shape = 'u8[131072]{0}', space=vmem, size = 0x20000, scoped, tag = 'input window, operand 0, single buffered']
    #allocation4 [shape = 's32[1]{0}', space=sflag, size = 0x4, scoped, tag = 'scoped memory for _linear_forward.1']
    #allocation5 [shape = 's32[1]{0}', space=sflag, size = 0x4, scoped, tag = 'scoped memory for _linear_forward.1']
    #allocation6 [shape = 'u8[1048576]{0}', space=vmem, size = 0x100000, scoped, tag = 'input window, operand 1, single buffered']
    #allocation7 [shape = 's32[1]{0}', space=sflag, size = 0x4, scoped, tag = 'scoped memory for _linear_forward.1']
    #allocation8 [shape = 'u8[131072]{0}', space=vmem, size = 0x20000, scoped, tag = 'output window, operand 0, single buffered']
    %8 = vsyncpa [#allocation4], 0
    %9 = vsyncpa [#allocation7], 0
    %10 = vsyncpa [#allocation5], 0
    // Predicated region
    $region2: #{_linear_forward.1} parent=1 // pred_check
      _
    $region3: #{_linear_forward.1} parent=1 // pred_check_branch
      %12 = sbr.rel (0) target = $region5
    $region4: #{_linear_forward.1} parent=1 // pred_region
      %s14 = ssub.s32 4096, 4096
      %15 = vsyncadd [#allocation4], %s14
      %s16 = sshll.u32 [#allocation3], 4
      %s17 = int_to_ptr.vmem [resolvable:$true] %s16
      %22 = dma.hbm_to_vmem [thread:$0]  %s0, 4096, %s17, [#allocation4], 512, 512, 32
    $region5: #{_linear_forward.1} parent=1 // pred_fallthru
      _
    // Predicated region
    $region6: #{_linear_forward.1} parent=1 // pred_check
      _
    $region7: #{_linear_forward.1} parent=1 // pred_check_branch
      %24 = sbr.rel (0) target = $region9
    $region8: #{_linear_forward.1} parent=1 // pred_region
      %s26 = ssub.s32 32768, 32768
      %27 = vsyncadd [#allocation7], %s26
      %s28 = sshll.u32 [#allocation6], 4
      %s29 = int_to_ptr.vmem [resolvable:$true] %s28
      %34 = dma.hbm_to_vmem [thread:$0]  %s1, 32768, %s29, [#allocation7], 512, 512, 32
    $region9: #{_linear_forward.1} parent=1 // pred_fallthru
      _
    // Predicated region
    $region10: #{_linear_forward.1} parent=1 // pred_check
      _
    $region11: #{_linear_forward.1} parent=1 // pred_check_branch
      %36 = sbr.rel (0) target = $region13
    $region12: #{_linear_forward.1} parent=1 // pred_region
      _
    $region13: #{_linear_forward.1} parent=1 // pred_fallthru
      _
    // Predicated region
    $region14: #{_linear_forward.1} parent=1 // pred_check
      _
    $region15: #{_linear_forward.1} parent=1 // pred_check_branch
      %38 = sbr.rel (0) target = $region17
    $region16: #{_linear_forward.1} parent=1 // pred_region
      %39 = dma.done [#allocation4], 4096
    $region17: #{_linear_forward.1} parent=1 // pred_fallthru
      _
    // Predicated region
    $region18: #{_linear_forward.1} parent=1 // pred_check
      _
    $region19: #{_linear_forward.1} parent=1 // pred_check_branch
      %41 = sbr.rel (0) target = $region21
    $region20: #{_linear_forward.1} parent=1 // pred_region
      %42 = dma.done [#allocation7], 32768
    $region21: #{_linear_forward.1} parent=1 // pred_fallthru
      _
    %p43 = scmp.eq.s32.totalorder 0, 0
    // Predicated region
    $region22: #{_linear_forward.1} parent=1 // pred_check
      %p44 = pneg %p43
    $region23: #{_linear_forward.1} parent=1 // pred_check_branch
      %46 = sbr.rel (%p44) target = $region25
    $region24: #{_linear_forward.1} parent=1 // pred_region
      %v47 = vld [vmem:[%s2] sm:$0xf]
      %v49 = vlaneseq
      %v50 = vshrl.u32 %v49, 7
      %v51 = vsub.s32 0, %v50
      %v52 = vrot.slane %v47, %v51
      %v53 = vlaneseq
      %v54 = vshrl.u32 %v53, 7
      %v55 = vsub.s32 1, %v54
      %v56 = vrot.slane %v47, %v55
      %v57 = vlaneseq
      %v58 = vshrl.u32 %v57, 7
      %v59 = vsub.s32 2, %v58
      %v60 = vrot.slane %v47, %v59
      %v61 = vlaneseq
      %v62 = vshrl.u32 %v61, 7
      %v63 = vsub.s32 3, %v62
      %v64 = vrot.slane %v47, %v63
      %69 = vst [vmem:[#allocation2] sm:$0xff] %v52
      %70 = vst [vmem:[#allocation2 + $0x8] sm:$0xff] %v56
      %71 = vst [vmem:[#allocation2 + $0x10] sm:$0xff] %v60
      %72 = vst [vmem:[#allocation2 + $0x18] sm:$0xff] %v64
      %73 = vst [vmem:[#allocation2 + $0x20] sm:$0xff] %v52
      %74 = vst [vmem:[#allocation2 + $0x28] sm:$0xff] %v56
      %75 = vst [vmem:[#allocation2 + $0x30] sm:$0xff] %v60
      %76 = vst [vmem:[#allocation2 + $0x38] sm:$0xff] %v64
      %77 = vst [vmem:[#allocation2 + $0x40] sm:$0xff] %v52
      %78 = vst [vmem:[#allocation2 + $0x48] sm:$0xff] %v56
      %79 = vst [vmem:[#allocation2 + $0x50] sm:$0xff] %v60
      %80 = vst [vmem:[#allocation2 + $0x58] sm:$0xff] %v64
      %81 = vst [vmem:[#allocation2 + $0x60] sm:$0xff] %v52
      %82 = vst [vmem:[#allocation2 + $0x68] sm:$0xff] %v56
      %83 = vst [vmem:[#allocation2 + $0x70] sm:$0xff] %v60
      %84 = vst [vmem:[#allocation2 + $0x78] sm:$0xff] %v64
      %85 = vst [vmem:[#allocation2 + $0x80] sm:$0xff] %v52
      %86 = vst [vmem:[#allocation2 + $0x88] sm:$0xff] %v56
      %87 = vst [vmem:[#allocation2 + $0x90] sm:$0xff] %v60
      %88 = vst [vmem:[#allocation2 + $0x98] sm:$0xff] %v64
      %89 = vst [vmem:[#allocation2 + $0xa0] sm:$0xff] %v52
      %90 = vst [vmem:[#allocation2 + $0xa8] sm:$0xff] %v56
      %91 = vst [vmem:[#allocation2 + $0xb0] sm:$0xff] %v60
      %92 = vst [vmem:[#allocation2 + $0xb8] sm:$0xff] %v64
      %93 = vst [vmem:[#allocation2 + $0xc0] sm:$0xff] %v52
      %94 = vst [vmem:[#allocation2 + $0xc8] sm:$0xff] %v56
      %95 = vst [vmem:[#allocation2 + $0xd0] sm:$0xff] %v60
      %96 = vst [vmem:[#allocation2 + $0xd8] sm:$0xff] %v64
      %97 = vst [vmem:[#allocation2 + $0xe0] sm:$0xff] %v52
      %98 = vst [vmem:[#allocation2 + $0xe8] sm:$0xff] %v56
      %99 = vst [vmem:[#allocation2 + $0xf0] sm:$0xff] %v60
      %100 = vst [vmem:[#allocation2 + $0xf8] sm:$0xff] %v64
    $region25: #{_linear_forward.1} parent=1 // pred_fallthru
      _
    %v101 = vld [vmem:[#allocation2] sm:$0xff]
    %v102 = vld [vmem:[#allocation2 + $0x8] sm:$0xff]
    %v103 = vld [vmem:[#allocation2 + $0x10] sm:$0xff]
    %v104 = vld [vmem:[#allocation2 + $0x18] sm:$0xff]
    %v105 = vld [vmem:[#allocation2 + $0x20] sm:$0xff]
    %v106 = vld [vmem:[#allocation2 + $0x28] sm:$0xff]
    %v107 = vld [vmem:[#allocation2 + $0x30] sm:$0xff]
    %v108 = vld [vmem:[#allocation2 + $0x38] sm:$0xff]
    %v109 = vld [vmem:[#allocation2 + $0x40] sm:$0xff]
    %v110 = vld [vmem:[#allocation2 + $0x48] sm:$0xff]
    %v111 = vld [vmem:[#allocation2 + $0x50] sm:$0xff]
    %v112 = vld [vmem:[#allocation2 + $0x58] sm:$0xff]
    %v113 = vld [vmem:[#allocation2 + $0x60] sm:$0xff]
    %v114 = vld [vmem:[#allocation2 + $0x68] sm:$0xff]
    %v115 = vld [vmem:[#allocation2 + $0x70] sm:$0xff]
    %v116 = vld [vmem:[#allocation2 + $0x78] sm:$0xff]
    %v117 = vld [vmem:[#allocation2 + $0x80] sm:$0xff]
    %v118 = vld [vmem:[#allocation2 + $0x88] sm:$0xff]
    %v119 = vld [vmem:[#allocation2 + $0x90] sm:$0xff]
    %v120 = vld [vmem:[#allocation2 + $0x98] sm:$0xff]
    %v121 = vld [vmem:[#allocation2 + $0xa0] sm:$0xff]
    %v122 = vld [vmem:[#allocation2 + $0xa8] sm:$0xff]
    %v123 = vld [vmem:[#allocation2 + $0xb0] sm:$0xff]
    %v124 = vld [vmem:[#allocation2 + $0xb8] sm:$0xff]
    %v125 = vld [vmem:[#allocation2 + $0xc0] sm:$0xff]
    %v126 = vld [vmem:[#allocation2 + $0xc8] sm:$0xff]
    %v127 = vld [vmem:[#allocation2 + $0xd0] sm:$0xff]
    %v128 = vld [vmem:[#allocation2 + $0xd8] sm:$0xff]
    %v129 = vld [vmem:[#allocation2 + $0xe0] sm:$0xff]
    %v130 = vld [vmem:[#allocation2 + $0xe8] sm:$0xff]
    %v131 = vld [vmem:[#allocation2 + $0xf0] sm:$0xff]
    %v132 = vld [vmem:[#allocation2 + $0xf8] sm:$0xff]
    %v133 = vld [vmem:[#allocation3] sm:$0xff]
    %v134 = vld [vmem:[#allocation3 + $0x8] sm:$0xff]
    %v135 = vld [vmem:[#allocation3 + $0x10] sm:$0xff]
    %v136 = vld [vmem:[#allocation3 + $0x18] sm:$0xff]
    %v137 = vld [vmem:[#allocation3 + $0x20] sm:$0xff]
    %v138 = vld [vmem:[#allocation3 + $0x28] sm:$0xff]
    %v139 = vld [vmem:[#allocation3 + $0x30] sm:$0xff]
    %v140 = vld [vmem:[#allocation3 + $0x38] sm:$0xff]
    %v141 = vld [vmem:[#allocation3 + $0x40] sm:$0xff]
    %v142 = vld [vmem:[#allocation3 + $0x48] sm:$0xff]
    %v143 = vld [vmem:[#allocation3 + $0x50] sm:$0xff]
    %v144 = vld [vmem:[#allocation3 + $0x58] sm:$0xff]
    %v145 = vld [vmem:[#allocation3 + $0x60] sm:$0xff]
    %v146 = vld [vmem:[#allocation3 + $0x68] sm:$0xff]
    %v147 = vld [vmem:[#allocation3 + $0x70] sm:$0xff]
    %v148 = vld [vmem:[#allocation3 + $0x78] sm:$0xff]
    %v149 = vld [vmem:[#allocation3 + $0x80] sm:$0xff]
    %v150 = vld [vmem:[#allocation3 + $0x88] sm:$0xff]
    %v151 = vld [vmem:[#allocation3 + $0x90] sm:$0xff]
    %v152 = vld [vmem:[#allocation3 + $0x98] sm:$0xff]
    %v153 = vld [vmem:[#allocation3 + $0xa0] sm:$0xff]
    %v154 = vld [vmem:[#allocation3 + $0xa8] sm:$0xff]
    %v155 = vld [vmem:[#allocation3 + $0xb0] sm:$0xff]
    %v156 = vld [vmem:[#allocation3 + $0xb8] sm:$0xff]
    %v157 = vld [vmem:[#allocation3 + $0xc0] sm:$0xff]
    %v158 = vld [vmem:[#allocation3 + $0xc8] sm:$0xff]
    %v159 = vld [vmem:[#allocation3 + $0xd0] sm:$0xff]
    %v160 = vld [vmem:[#allocation3 + $0xd8] sm:$0xff]
    %v161 = vld [vmem:[#allocation3 + $0xe0] sm:$0xff]
    %v162 = vld [vmem:[#allocation3 + $0xe8] sm:$0xff]
    %v163 = vld [vmem:[#allocation3 + $0xf0] sm:$0xff]
    %v164 = vld [vmem:[#allocation3 + $0xf8] sm:$0xff]
    %v165 = vld [vmem:[#allocation6] sm:$0xff]
    %v166 = vld [vmem:[#allocation6 + $0x8] sm:$0xff]
    %v167 = vld [vmem:[#allocation6 + $0x10] sm:$0xff]
    %v168 = vld [vmem:[#allocation6 + $0x18] sm:$0xff]
    %v169 = vld [vmem:[#allocation6 + $0x20] sm:$0xff]
    %v170 = vld [vmem:[#allocation6 + $0x28] sm:$0xff]
    %v171 = vld [vmem:[#allocation6 + $0x30] sm:$0xff]
    %v172 = vld [vmem:[#allocation6 + $0x38] sm:$0xff]
    %v173 = vld [vmem:[#allocation6 + $0x40] sm:$0xff]
    %v174 = vld [vmem:[#allocation6 + $0x48] sm:$0xff]
    %v175 = vld [vmem:[#allocation6 + $0x50] sm:$0xff]
    %v176 = vld [vmem:[#allocation6 + $0x58] sm:$0xff]
    %v177 = vld [vmem:[#allocation6 + $0x60] sm:$0xff]
    %v178 = vld [vmem:[#allocation6 + $0x68] sm:$0xff]
    %v179 = vld [vmem:[#allocation6 + $0x70] sm:$0xff]
    %v180 = vld [vmem:[#allocation6 + $0x78] sm:$0xff]
    %v181 = vld [vmem:[#allocation6 + $0x80] sm:$0xff]
    %v182 = vld [vmem:[#allocation6 + $0x88] sm:$0xff]
    %v183 = vld [vmem:[#allocation6 + $0x90] sm:$0xff]
    %v184 = vld [vmem:[#allocation6 + $0x98] sm:$0xff]
    %v185 = vld [vmem:[#allocation6 + $0xa0] sm:$0xff]
    %v186 = vld [vmem:[#allocation6 + $0xa8] sm:$0xff]
    %v187 = vld [vmem:[#allocation6 + $0xb0] sm:$0xff]
    %v188 = vld [vmem:[#allocation6 + $0xb8] sm:$0xff]
    %v189 = vld [vmem:[#allocation6 + $0xc0] sm:$0xff]
    %v190 = vld [vmem:[#allocation6 + $0xc8] sm:$0xff]
    %v191 = vld [vmem:[#allocation6 + $0xd0] sm:$0xff]
    %v192 = vld [vmem:[#allocation6 + $0xd8] sm:$0xff]
    %v193 = vld [vmem:[#allocation6 + $0xe0] sm:$0xff]
    %v194 = vld [vmem:[#allocation6 + $0xe8] sm:$0xff]
    %v195 = vld [vmem:[#allocation6 + $0xf0] sm:$0xff]
    %v196 = vld [vmem:[#allocation6 + $0xf8] sm:$0xff]
    %v197 = vld [vmem:[#allocation6 + $0x100] sm:$0xff]
    %v198 = vld [vmem:[#allocation6 + $0x108] sm:$0xff]
    %v199 = vld [vmem:[#allocation6 + $0x110] sm:$0xff]
    %v200 = vld [vmem:[#allocation6 + $0x118] sm:$0xff]
    %v201 = vld [vmem:[#allocation6 + $0x120] sm:$0xff]
    %v202 = vld [vmem:[#allocation6 + $0x128] sm:$0xff]
    %v203 = vld [vmem:[#allocation6 + $0x130] sm:$0xff]
    %v204 = vld [vmem:[#allocation6 + $0x138] sm:$0xff]
    %v205 = vld [vmem:[#allocation6 + $0x140] sm:$0xff]
    %v206 = vld [vmem:[#allocation6 + $0x148] sm:$0xff]
    %v207 = vld [vmem:[#allocation6 + $0x150] sm:$0xff]
    %v208 = vld [vmem:[#allocation6 + $0x158] sm:$0xff]
    %v209 = vld [vmem:[#allocation6 + $0x160] sm:$0xff]
    %v210 = vld [vmem:[#allocation6 + $0x168] sm:$0xff]
    %v211 = vld [vmem:[#allocation6 + $0x170] sm:$0xff]
    %v212 = vld [vmem:[#allocation6 + $0x178] sm:$0xff]
    %v213 = vld [vmem:[#allocation6 + $0x180] sm:$0xff]
    %v214 = vld [vmem:[#allocation6 + $0x188] sm:$0xff]
    %v215 = vld [vmem:[#allocation6 + $0x190] sm:$0xff]
    %v216 = vld [vmem:[#allocation6 + $0x198] sm:$0xff]
    %v217 = vld [vmem:[#allocation6 + $0x1a0] sm:$0xff]
    %v218 = vld [vmem:[#allocation6 + $0x1a8] sm:$0xff]
    %v219 = vld [vmem:[#allocation6 + $0x1b0] sm:$0xff]
    %v220 = vld [vmem:[#allocation6 + $0x1b8] sm:$0xff]
    %v221 = vld [vmem:[#allocation6 + $0x1c0] sm:$0xff]
    %v222 = vld [vmem:[#allocation6 + $0x1c8] sm:$0xff]
    %v223 = vld [vmem:[#allocation6 + $0x1d0] sm:$0xff]
    %v224 = vld [vmem:[#allocation6 + $0x1d8] sm:$0xff]
    %v225 = vld [vmem:[#allocation6 + $0x1e0] sm:$0xff]
    %v226 = vld [vmem:[#allocation6 + $0x1e8] sm:$0xff]
    %v227 = vld [vmem:[#allocation6 + $0x1f0] sm:$0xff]
    %v228 = vld [vmem:[#allocation6 + $0x1f8] sm:$0xff]
    %v229 = vld [vmem:[#allocation6 + $0x200] sm:$0xff]
    %v230 = vld [vmem:[#allocation6 + $0x208] sm:$0xff]
    %v231 = vld [vmem:[#allocation6 + $0x210] sm:$0xff]
    %v232 = vld [vmem:[#allocation6 + $0x218] sm:$0xff]
    %v233 = vld [vmem:[#allocation6 + $0x220] sm:$0xff]
    %v234 = vld [vmem:[#allocation6 + $0x228] sm:$0xff]
    %v235 = vld [vmem:[#allocation6 + $0x230] sm:$0xff]
    %v236 = vld [vmem:[#allocation6 + $0x238] sm:$0xff]
    %v237 = vld [vmem:[#allocation6 + $0x240] sm:$0xff]
    %v238 = vld [vmem:[#allocation6 + $0x248] sm:$0xff]
    %v239 = vld [vmem:[#allocation6 + $0x250] sm:$0xff]
    %v240 = vld [vmem:[#allocation6 + $0x258] sm:$0xff]
    %v241 = vld [vmem:[#allocation6 + $0x260] sm:$0xff]
    %v242 = vld [vmem:[#allocation6 + $0x268] sm:$0xff]
    %v243 = vld [vmem:[#allocation6 + $0x270] sm:$0xff]
    %v244 = vld [vmem:[#allocation6 + $0x278] sm:$0xff]
    %v245 = vld [vmem:[#allocation6 + $0x280] sm:$0xff]
    %v246 = vld [vmem:[#allocation6 + $0x288] sm:$0xff]
    %v247 = vld [vmem:[#allocation6 + $0x290] sm:$0xff]
    %v248 = vld [vmem:[#allocation6 + $0x298] sm:$0xff]
    %v249 = vld [vmem:[#allocation6 + $0x2a0] sm:$0xff]
    %v250 = vld [vmem:[#allocation6 + $0x2a8] sm:$0xff]
    %v251 = vld [vmem:[#allocation6 + $0x2b0] sm:$0xff]
    %v252 = vld [vmem:[#allocation6 + $0x2b8] sm:$0xff]
    %v253 = vld [vmem:[#allocation6 + $0x2c0] sm:$0xff]
    %v254 = vld [vmem:[#allocation6 + $0x2c8] sm:$0xff]
    %v255 = vld [vmem:[#allocation6 + $0x2d0] sm:$0xff]
    %v256 = vld [vmem:[#allocation6 + $0x2d8] sm:$0xff]
    %v257 = vld [vmem:[#allocation6 + $0x2e0] sm:$0xff]
    %v258 = vld [vmem:[#allocation6 + $0x2e8] sm:$0xff]
    %v259 = vld [vmem:[#allocation6 + $0x2f0] sm:$0xff]
    %v260 = vld [vmem:[#allocation6 + $0x2f8] sm:$0xff]
    %v261 = vld [vmem:[#allocation6 + $0x300] sm:$0xff]
    %v262 = vld [vmem:[#allocation6 + $0x308] sm:$0xff]
    %v263 = vld [vmem:[#allocation6 + $0x310] sm:$0xff]
    %v264 = vld [vmem:[#allocation6 + $0x318] sm:$0xff]
    %v265 = vld [vmem:[#allocation6 + $0x320] sm:$0xff]
    %v266 = vld [vmem:[#allocation6 + $0x328] sm:$0xff]
    %v267 = vld [vmem:[#allocation6 + $0x330] sm:$0xff]
    %v268 = vld [vmem:[#allocation6 + $0x338] sm:$0xff]
    %v269 = vld [vmem:[#allocation6 + $0x340] sm:$0xff]
    %v270 = vld [vmem:[#allocation6 + $0x348] sm:$0xff]
    %v271 = vld [vmem:[#allocation6 + $0x350] sm:$0xff]
    %v272 = vld [vmem:[#allocation6 + $0x358] sm:$0xff]
    %v273 = vld [vmem:[#allocation6 + $0x360] sm:$0xff]
    %v274 = vld [vmem:[#allocation6 + $0x368] sm:$0xff]
    %v275 = vld [vmem:[#allocation6 + $0x370] sm:$0xff]
    %v276 = vld [vmem:[#allocation6 + $0x378] sm:$0xff]
    %v277 = vld [vmem:[#allocation6 + $0x380] sm:$0xff]
    %v278 = vld [vmem:[#allocation6 + $0x388] sm:$0xff]
    %v279 = vld [vmem:[#allocation6 + $0x390] sm:$0xff]
    %v280 = vld [vmem:[#allocation6 + $0x398] sm:$0xff]
    %v281 = vld [vmem:[#allocation6 + $0x3a0] sm:$0xff]
    %v282 = vld [vmem:[#allocation6 + $0x3a8] sm:$0xff]
    %v283 = vld [vmem:[#allocation6 + $0x3b0] sm:$0xff]
    %v284 = vld [vmem:[#allocation6 + $0x3b8] sm:$0xff]
    %v285 = vld [vmem:[#allocation6 + $0x3c0] sm:$0xff]
    %v286 = vld [vmem:[#allocation6 + $0x3c8] sm:$0xff]
    %v287 = vld [vmem:[#allocation6 + $0x3d0] sm:$0xff]
    %v288 = vld [vmem:[#allocation6 + $0x3d8] sm:$0xff]
    %v289 = vld [vmem:[#allocation6 + $0x3e0] sm:$0xff]
    %v290 = vld [vmem:[#allocation6 + $0x3e8] sm:$0xff]
    %v291 = vld [vmem:[#allocation6 + $0x3f0] sm:$0xff]
    %v292 = vld [vmem:[#allocation6 + $0x3f8] sm:$0xff]
    %v293 = vld [vmem:[#allocation6 + $0x400] sm:$0xff]
    %v294 = vld [vmem:[#allocation6 + $0x408] sm:$0xff]
    %v295 = vld [vmem:[#allocation6 + $0x410] sm:$0xff]
    %v296 = vld [vmem:[#allocation6 + $0x418] sm:$0xff]
    %v297 = vld [vmem:[#allocation6 + $0x420] sm:$0xff]
    %v298 = vld [vmem:[#allocation6 + $0x428] sm:$0xff]
    %v299 = vld [vmem:[#allocation6 + $0x430] sm:$0xff]
    %v300 = vld [vmem:[#allocation6 + $0x438] sm:$0xff]
    %v301 = vld [vmem:[#allocation6 + $0x440] sm:$0xff]
    %v302 = vld [vmem:[#allocation6 + $0x448] sm:$0xff]
    %v303 = vld [vmem:[#allocation6 + $0x450] sm:$0xff]
    %v304 = vld [vmem:[#allocation6 + $0x458] sm:$0xff]
    %v305 = vld [vmem:[#allocation6 + $0x460] sm:$0xff]
    %v306 = vld [vmem:[#allocation6 + $0x468] sm:$0xff]
    %v307 = vld [vmem:[#allocation6 + $0x470] sm:$0xff]
    %v308 = vld [vmem:[#allocation6 + $0x478] sm:$0xff]
    %v309 = vld [vmem:[#allocation6 + $0x480] sm:$0xff]
    %v310 = vld [vmem:[#allocation6 + $0x488] sm:$0xff]
    %v311 = vld [vmem:[#allocation6 + $0x490] sm:$0xff]
    %v312 = vld [vmem:[#allocation6 + $0x498] sm:$0xff]
    %v313 = vld [vmem:[#allocation6 + $0x4a0] sm:$0xff]
    %v314 = vld [vmem:[#allocation6 + $0x4a8] sm:$0xff]
    %v315 = vld [vmem:[#allocation6 + $0x4b0] sm:$0xff]
    %v316 = vld [vmem:[#allocation6 + $0x4b8] sm:$0xff]
    %v317 = vld [vmem:[#allocation6 + $0x4c0] sm:$0xff]
    %v318 = vld [vmem:[#allocation6 + $0x4c8] sm:$0xff]
    %v319 = vld [vmem:[#allocation6 + $0x4d0] sm:$0xff]
    %v320 = vld [vmem:[#allocation6 + $0x4d8] sm:$0xff]
    %v321 = vld [vmem:[#allocation6 + $0x4e0] sm:$0xff]
    %v322 = vld [vmem:[#allocation6 + $0x4e8] sm:$0xff]
    %v323 = vld [vmem:[#allocation6 + $0x4f0] sm:$0xff]
    %v324 = vld [vmem:[#allocation6 + $0x4f8] sm:$0xff]
    %v325 = vld [vmem:[#allocation6 + $0x500] sm:$0xff]
    %v326 = vld [vmem:[#allocation6 + $0x508] sm:$0xff]
    %v327 = vld [vmem:[#allocation6 + $0x510] sm:$0xff]
    %v328 = vld [vmem:[#allocation6 + $0x518] sm:$0xff]
    %v329 = vld [vmem:[#allocation6 + $0x520] sm:$0xff]
    %v330 = vld [vmem:[#allocation6 + $0x528] sm:$0xff]
    %v331 = vld [vmem:[#allocation6 + $0x530] sm:$0xff]
    %v332 = vld [vmem:[#allocation6 + $0x538] sm:$0xff]
    %v333 = vld [vmem:[#allocation6 + $0x540] sm:$0xff]
    %v334 = vld [vmem:[#allocation6 + $0x548] sm:$0xff]
    %v335 = vld [vmem:[#allocation6 + $0x550] sm:$0xff]
    %v336 = vld [vmem:[#allocation6 + $0x558] sm:$0xff]
    %v337 = vld [vmem:[#allocation6 + $0x560] sm:$0xff]
    %v338 = vld [vmem:[#allocation6 + $0x568] sm:$0xff]
    %v339 = vld [vmem:[#allocation6 + $0x570] sm:$0xff]
    %v340 = vld [vmem:[#allocation6 + $0x578] sm:$0xff]
    %v341 = vld [vmem:[#allocation6 + $0x580] sm:$0xff]
    %v342 = vld [vmem:[#allocation6 + $0x588] sm:$0xff]
    %v343 = vld [vmem:[#allocation6 + $0x590] sm:$0xff]
    %v344 = vld [vmem:[#allocation6 + $0x598] sm:$0xff]
    %v345 = vld [vmem:[#allocation6 + $0x5a0] sm:$0xff]
    %v346 = vld [vmem:[#allocation6 + $0x5a8] sm:$0xff]
    %v347 = vld [vmem:[#allocation6 + $0x5b0] sm:$0xff]
    %v348 = vld [vmem:[#allocation6 + $0x5b8] sm:$0xff]
    %v349 = vld [vmem:[#allocation6 + $0x5c0] sm:$0xff]
    %v350 = vld [vmem:[#allocation6 + $0x5c8] sm:$0xff]
    %v351 = vld [vmem:[#allocation6 + $0x5d0] sm:$0xff]
    %v352 = vld [vmem:[#allocation6 + $0x5d8] sm:$0xff]
    %v353 = vld [vmem:[#allocation6 + $0x5e0] sm:$0xff]
    %v354 = vld [vmem:[#allocation6 + $0x5e8] sm:$0xff]
    %v355 = vld [vmem:[#allocation6 + $0x5f0] sm:$0xff]
    %v356 = vld [vmem:[#allocation6 + $0x5f8] sm:$0xff]
    %v357 = vld [vmem:[#allocation6 + $0x600] sm:$0xff]
    %v358 = vld [vmem:[#allocation6 + $0x608] sm:$0xff]
    %v359 = vld [vmem:[#allocation6 + $0x610] sm:$0xff]
    %v360 = vld [vmem:[#allocation6 + $0x618] sm:$0xff]
    %v361 = vld [vmem:[#allocation6 + $0x620] sm:$0xff]
    %v362 = vld [vmem:[#allocation6 + $0x628] sm:$0xff]
    %v363 = vld [vmem:[#allocation6 + $0x630] sm:$0xff]
    %v364 = vld [vmem:[#allocation6 + $0x638] sm:$0xff]
    %v365 = vld [vmem:[#allocation6 + $0x640] sm:$0xff]
    %v366 = vld [vmem:[#allocation6 + $0x648] sm:$0xff]
    %v367 = vld [vmem:[#allocation6 + $0x650] sm:$0xff]
    %v368 = vld [vmem:[#allocation6 + $0x658] sm:$0xff]
    %v369 = vld [vmem:[#allocation6 + $0x660] sm:$0xff]
    %v370 = vld [vmem:[#allocation6 + $0x668] sm:$0xff]
    %v371 = vld [vmem:[#allocation6 + $0x670] sm:$0xff]
    %v372 = vld [vmem:[#allocation6 + $0x678] sm:$0xff]
    %v373 = vld [vmem:[#allocation6 + $0x680] sm:$0xff]
    %v374 = vld [vmem:[#allocation6 + $0x688] sm:$0xff]
    %v375 = vld [vmem:[#allocation6 + $0x690] sm:$0xff]
    %v376 = vld [vmem:[#allocation6 + $0x698] sm:$0xff]
    %v377 = vld [vmem:[#allocation6 + $0x6a0] sm:$0xff]
    %v378 = vld [vmem:[#allocation6 + $0x6a8] sm:$0xff]
    %v379 = vld [vmem:[#allocation6 + $0x6b0] sm:$0xff]
    %v380 = vld [vmem:[#allocation6 + $0x6b8] sm:$0xff]
    %v381 = vld [vmem:[#allocation6 + $0x6c0] sm:$0xff]
    %v382 = vld [vmem:[#allocation6 + $0x6c8] sm:$0xff]
    %v383 = vld [vmem:[#allocation6 + $0x6d0] sm:$0xff]
    %v384 = vld [vmem:[#allocation6 + $0x6d8] sm:$0xff]
    %v385 = vld [vmem:[#allocation6 + $0x6e0] sm:$0xff]
    %v386 = vld [vmem:[#allocation6 + $0x6e8] sm:$0xff]
    %v387 = vld [vmem:[#allocation6 + $0x6f0] sm:$0xff]
    %v388 = vld [vmem:[#allocation6 + $0x6f8] sm:$0xff]
    %v389 = vld [vmem:[#allocation6 + $0x700] sm:$0xff]
    %v390 = vld [vmem:[#allocation6 + $0x708] sm:$0xff]
    %v391 = vld [vmem:[#allocation6 + $0x710] sm:$0xff]
    %v392 = vld [vmem:[#allocation6 + $0x718] sm:$0xff]
    %v393 = vld [vmem:[#allocation6 + $0x720] sm:$0xff]
    %v394 = vld [vmem:[#allocation6 + $0x728] sm:$0xff]
    %v395 = vld [vmem:[#allocation6 + $0x730] sm:$0xff]
    %v396 = vld [vmem:[#allocation6 + $0x738] sm:$0xff]
    %v397 = vld [vmem:[#allocation6 + $0x740] sm:$0xff]
    %v398 = vld [vmem:[#allocation6 + $0x748] sm:$0xff]
    %v399 = vld [vmem:[#allocation6 + $0x750] sm:$0xff]
    %v400 = vld [vmem:[#allocation6 + $0x758] sm:$0xff]
    %v401 = vld [vmem:[#allocation6 + $0x760] sm:$0xff]
    %v402 = vld [vmem:[#allocation6 + $0x768] sm:$0xff]
    %v403 = vld [vmem:[#allocation6 + $0x770] sm:$0xff]
    %v404 = vld [vmem:[#allocation6 + $0x778] sm:$0xff]
    %v405 = vld [vmem:[#allocation6 + $0x780] sm:$0xff]
    %v406 = vld [vmem:[#allocation6 + $0x788] sm:$0xff]
    %v407 = vld [vmem:[#allocation6 + $0x790] sm:$0xff]
    %v408 = vld [vmem:[#allocation6 + $0x798] sm:$0xff]
    %v409 = vld [vmem:[#allocation6 + $0x7a0] sm:$0xff]
    %v410 = vld [vmem:[#allocation6 + $0x7a8] sm:$0xff]
    %v411 = vld [vmem:[#allocation6 + $0x7b0] sm:$0xff]
    %v412 = vld [vmem:[#allocation6 + $0x7b8] sm:$0xff]
    %v413 = vld [vmem:[#allocation6 + $0x7c0] sm:$0xff]
    %v414 = vld [vmem:[#allocation6 + $0x7c8] sm:$0xff]
    %v415 = vld [vmem:[#allocation6 + $0x7d0] sm:$0xff]
    %v416 = vld [vmem:[#allocation6 + $0x7d8] sm:$0xff]
    %v417 = vld [vmem:[#allocation6 + $0x7e0] sm:$0xff]
    %v418 = vld [vmem:[#allocation6 + $0x7e8] sm:$0xff]
    %v419 = vld [vmem:[#allocation6 + $0x7f0] sm:$0xff]
    %v420 = vld [vmem:[#allocation6 + $0x7f8] sm:$0xff]
    %421 = vmatprep.subr.mxu0 %v166
    %422 = vmatpush1.msra.mxu0 %v165
    %423 = vmatprep.subr.mxu0 %v170
    %424 = vmatpush1.msra.mxu0 %v169
    %425 = vmatprep.subr.mxu0 %v174
    %426 = vmatpush1.msra.mxu0 %v173
    %427 = vmatprep.subr.mxu0 %v178
    %428 = vmatpush1.msra.mxu0 %v177
    %429 = vmatprep.subr.mxu0 %v182
    %430 = vmatpush1.msra.mxu0 %v181
    %431 = vmatprep.subr.mxu0 %v186
    %432 = vmatpush1.msra.mxu0 %v185
    %433 = vmatprep.subr.mxu0 %v190
    %434 = vmatpush1.msra.mxu0 %v189
    %435 = vmatprep.subr.mxu0 %v194
    %436 = vmatpush1.msra.mxu0 %v193
    %437 = vmatprep.subr.mxu0 %v198
    %438 = vmatpush1.msra.mxu0 %v197
    %439 = vmatprep.subr.mxu0 %v202
    %440 = vmatpush1.msra.mxu0 %v201
    %441 = vmatprep.subr.mxu0 %v206
    %442 = vmatpush1.msra.mxu0 %v205
    %443 = vmatprep.subr.mxu0 %v210
    %444 = vmatpush1.msra.mxu0 %v209
    %445 = vmatprep.subr.mxu0 %v214
    %446 = vmatpush1.msra.mxu0 %v213
    %447 = vmatprep.subr.mxu0 %v218
    %448 = vmatpush1.msra.mxu0 %v217
    %449 = vmatprep.subr.mxu0 %v222
    %450 = vmatpush1.msra.mxu0 %v221
    %451 = vmatprep.subr.mxu0 %v226
    %452 = vmatpush1.msra.mxu0 %v225
    %453 = vmatprep.subr.mxu0 %v230
    %454 = vmatpush1.msra.mxu0 %v229
    %455 = vmatprep.subr.mxu0 %v234
    %456 = vmatpush1.msra.mxu0 %v233
    %457 = vmatprep.subr.mxu0 %v238
    %458 = vmatpush1.msra.mxu0 %v237
    %459 = vmatprep.subr.mxu0 %v242
    %460 = vmatpush1.msra.mxu0 %v241
    %461 = vmatprep.subr.mxu0 %v246
    %462 = vmatpush1.msra.mxu0 %v245
    %463 = vmatprep.subr.mxu0 %v250
    %464 = vmatpush1.msra.mxu0 %v249
    %465 = vmatprep.subr.mxu0 %v254
    %466 = vmatpush1.msra.mxu0 %v253
    %467 = vmatprep.subr.mxu0 %v258
    %468 = vmatpush1.msra.mxu0 %v257
    %469 = vmatprep.subr.mxu0 %v262
    %470 = vmatpush1.msra.mxu0 %v261
    %471 = vmatprep.subr.mxu0 %v266
    %472 = vmatpush1.msra.mxu0 %v265
    %473 = vmatprep.subr.mxu0 %v270
    %474 = vmatpush1.msra.mxu0 %v269
    %475 = vmatprep.subr.mxu0 %v274
    %476 = vmatpush1.msra.mxu0 %v273
    %477 = vmatprep.subr.mxu0 %v278
    %478 = vmatpush1.msra.mxu0 %v277
    %479 = vmatprep.subr.mxu0 %v282
    %480 = vmatpush1.msra.mxu0 %v281
    %481 = vmatprep.subr.mxu0 %v286
    %482 = vmatpush1.msra.mxu0 %v285
    %483 = vmatprep.subr.mxu0 %v290
    %484 = vmatpush1.msra.mxu0 %v289
    %485 = vmatprep.mubr.f32.mxu0 %v134
    %486 = vmatmul.mubr.f32.gmra.mrb[0].mxu0 %v133
    %v487 = vpop.f32.mrb[0].mxu0
    %v488 = vadd.f32 0.0, %v487
    %v489 = vpop.f32.mrb[0].mxu0
    %v490 = vadd.f32 0.0, %v489
    %491 = vmatprep.mubr.f32.mxu0 %v138
    %492 = vmatmul.mubr.f32.gmra.mrb[0].mxu0 %v137
    %v493 = vpop.f32.mrb[0].mxu0
    %v494 = vadd.f32 0.0, %v493
    %v495 = vpop.f32.mrb[0].mxu0
    %v496 = vadd.f32 0.0, %v495
    %497 = vmatprep.mubr.f32.mxu0 %v142
    %498 = vmatmul.mubr.f32.gmra.mrb[0].mxu0 %v141
    %v499 = vpop.f32.mrb[0].mxu0
    %v500 = vadd.f32 0.0, %v499
    %v501 = vpop.f32.mrb[0].mxu0
    %v502 = vadd.f32 0.0, %v501
    %503 = vmatprep.mubr.f32.mxu0 %v146
    %504 = vmatmul.mubr.f32.gmra.mrb[0].mxu0 %v145
    %v505 = vpop.f32.mrb[0].mxu0
    %v506 = vadd.f32 0.0, %v505
    %v507 = vpop.f32.mrb[0].mxu0
    %v508 = vadd.f32 0.0, %v507
    %509 = vmatprep.mubr.f32.mxu0 %v150
    %510 = vmatmul.mubr.f32.gmra.mrb[0].mxu0 %v149
    %v511 = vpop.f32.mrb[0].mxu0
    %v512 = vadd.f32 0.0, %v511
    %v513 = vpop.f32.mrb[0].mxu0
    %v514 = vadd.f32 0.0, %v513
    %515 = vmatprep.mubr.f32.mxu0 %v154
    %516 = vmatmul.mubr.f32.gmra.mrb[0].mxu0 %v153
    %v517 = vpop.f32.mrb[0].mxu0
    %v518 = vadd.f32 0.0, %v517
    %v519 = vpop.f32.mrb[0].mxu0
    %v520 = vadd.f32 0.0, %v519
    %521 = vmatprep.mubr.f32.mxu0 %v158
    %522 = vmatmul.mubr.f32.gmra.mrb[0].mxu0 %v157
    %v523 = vpop.f32.mrb[0].mxu0
    %v524 = vadd.f32 0.0, %v523
    %v525 = vpop.f32.mrb[0].mxu0
    %v526 = vadd.f32 0.0, %v525
    %527 = vmatprep.mubr.f32.mxu0 %v162
    %528 = vmatmul.mubr.f32.gmra.mrb[0].mxu0 %v161
    %v529 = vpop.f32.mrb[0].mxu0
    %v530 = vadd.f32 0.0, %v529
    %v531 = vpop.f32.mrb[0].mxu0
    %v532 = vadd.f32 0.0, %v531
    %533 = vdwg.mxu0
    %534 = vmatprep.subr.mxu0 %v294
    %535 = vmatpush1.msra.mxu0 %v293
    %536 = vmatprep.subr.mxu0 %v298
    %537 = vmatpush1.msra.mxu0 %v297
    %538 = vmatprep.subr.mxu0 %v302
    %539 = vmatpush1.msra.mxu0 %v301
    %540 = vmatprep.subr.mxu0 %v306
    %541 = vmatpush1.msra.mxu0 %v305
    %542 = vmatprep.subr.mxu0 %v310
    %543 = vmatpush1.msra.mxu0 %v309
    %544 = vmatprep.subr.mxu0 %v314
    %545 = vmatpush1.msra.mxu0 %v313
    %546 = vmatprep.subr.mxu0 %v318
    %547 = vmatpush1.msra.mxu0 %v317
    %548 = vmatprep.subr.mxu0 %v322
    %549 = vmatpush1.msra.mxu0 %v321
    %550 = vmatprep.subr.mxu0 %v326
    %551 = vmatpush1.msra.mxu0 %v325
    %552 = vmatprep.subr.mxu0 %v330
    %553 = vmatpush1.msra.mxu0 %v329
    %554 = vmatprep.subr.mxu0 %v334
    %555 = vmatpush1.msra.mxu0 %v333
    %556 = vmatprep.subr.mxu0 %v338
    %557 = vmatpush1.msra.mxu0 %v337
    %558 = vmatprep.subr.mxu0 %v342
    %559 = vmatpush1.msra.mxu0 %v341
    %560 = vmatprep.subr.mxu0 %v346
    %561 = vmatpush1.msra.mxu0 %v345
    %562 = vmatprep.subr.mxu0 %v350
    %563 = vmatpush1.msra.mxu0 %v349
    %564 = vmatprep.subr.mxu0 %v354
    %565 = vmatpush1.msra.mxu0 %v353
    %566 = vmatprep.subr.mxu0 %v358
    %567 = vmatpush1.msra.mxu0 %v357
    %568 = vmatprep.subr.mxu0 %v362
    %569 = vmatpush1.msra.mxu0 %v361
    %570 = vmatprep.subr.mxu0 %v366
    %571 = vmatpush1.msra.mxu0 %v365
    %572 = vmatprep.subr.mxu0 %v370
    %573 = vmatpush1.msra.mxu0 %v369
    %574 = vmatprep.subr.mxu0 %v374
    %575 = vmatpush1.msra.mxu0 %v373
    %576 = vmatprep.subr.mxu0 %v378
    %577 = vmatpush1.msra.mxu0 %v377
    %578 = vmatprep.subr.mxu0 %v382
    %579 = vmatpush1.msra.mxu0 %v381
    %580 = vmatprep.subr.mxu0 %v386
    %581 = vmatpush1.msra.mxu0 %v385
    %582 = vmatprep.subr.mxu0 %v390
    %583 = vmatpush1.msra.mxu0 %v389
    %584 = vmatprep.subr.mxu0 %v394
    %585 = vmatpush1.msra.mxu0 %v393
    %586 = vmatprep.subr.mxu0 %v398
    %587 = vmatpush1.msra.mxu0 %v397
    %588 = vmatprep.subr.mxu0 %v402
    %589 = vmatpush1.msra.mxu0 %v401
    %590 = vmatprep.subr.mxu0 %v406
    %591 = vmatpush1.msra.mxu0 %v405
    %592 = vmatprep.subr.mxu0 %v410
    %593 = vmatpush1.msra.mxu0 %v409
    %594 = vmatprep.subr.mxu0 %v414
    %595 = vmatpush1.msra.mxu0 %v413
    %596 = vmatprep.subr.mxu0 %v418
    %597 = vmatpush1.msra.mxu0 %v417
    %598 = vmatprep.mubr.f32.mxu0 %v136
    %599 = vmatmul.mubr.f32.gmra.mrb[0].mxu0 %v135
    %v600 = vpop.f32.mrb[0].mxu0
    %v601 = vadd.f32 %v488, %v600
    %v602 = vpop.f32.mrb[0].mxu0
    %v603 = vadd.f32 %v490, %v602
    %604 = vmatprep.mubr.f32.mxu0 %v140
    %605 = vmatmul.mubr.f32.gmra.mrb[0].mxu0 %v139
    %v606 = vpop.f32.mrb[0].mxu0
    %v607 = vadd.f32 %v494, %v606
    %v608 = vpop.f32.mrb[0].mxu0
    %v609 = vadd.f32 %v496, %v608
    %610 = vmatprep.mubr.f32.mxu0 %v144
    %611 = vmatmul.mubr.f32.gmra.mrb[0].mxu0 %v143
    %v612 = vpop.f32.mrb[0].mxu0
    %v613 = vadd.f32 %v500, %v612
    %v614 = vpop.f32.mrb[0].mxu0
    %v615 = vadd.f32 %v502, %v614
    %616 = vmatprep.mubr.f32.mxu0 %v148
    %617 = vmatmul.mubr.f32.gmra.mrb[0].mxu0 %v147
    %v618 = vpop.f32.mrb[0].mxu0
    %v619 = vadd.f32 %v506, %v618
    %v620 = vpop.f32.mrb[0].mxu0
    %v621 = vadd.f32 %v508, %v620
    %622 = vmatprep.mubr.f32.mxu0 %v152
    %623 = vmatmul.mubr.f32.gmra.mrb[0].mxu0 %v151
    %v624 = vpop.f32.mrb[0].mxu0
    %v625 = vadd.f32 %v512, %v624
    %v626 = vpop.f32.mrb[0].mxu0
    %v627 = vadd.f32 %v514, %v626
    %628 = vmatprep.mubr.f32.mxu0 %v156
    %629 = vmatmul.mubr.f32.gmra.mrb[0].mxu0 %v155
    %v630 = vpop.f32.mrb[0].mxu0
    %v631 = vadd.f32 %v518, %v630
    %v632 = vpop.f32.mrb[0].mxu0
    %v633 = vadd.f32 %v520, %v632
    %634 = vmatprep.mubr.f32.mxu0 %v160
    %635 = vmatmul.mubr.f32.gmra.mrb[0].mxu0 %v159
    %v636 = vpop.f32.mrb[0].mxu0
    %v637 = vadd.f32 %v524, %v636
    %v638 = vpop.f32.mrb[0].mxu0
    %v639 = vadd.f32 %v526, %v638
    %640 = vmatprep.mubr.f32.mxu0 %v164
    %641 = vmatmul.mubr.f32.gmra.mrb[0].mxu0 %v163
    %v642 = vpop.f32.mrb[0].mxu0
    %v643 = vadd.f32 %v530, %v642
    %v644 = vpop.f32.mrb[0].mxu0
    %v645 = vadd.f32 %v532, %v644
    %646 = vdwg.mxu0
    %647 = vmatprep.subr.mxu0 %v168
    %648 = vmatpush1.msra.mxu0 %v167
    %649 = vmatprep.subr.mxu0 %v172
    %650 = vmatpush1.msra.mxu0 %v171
    %651 = vmatprep.subr.mxu0 %v176
    %652 = vmatpush1.msra.mxu0 %v175
    %653 = vmatprep.subr.mxu0 %v180
    %654 = vmatpush1.msra.mxu0 %v179
    %655 = vmatprep.subr.mxu0 %v184
    %656 = vmatpush1.msra.mxu0 %v183
    %657 = vmatprep.subr.mxu0 %v188
    %658 = vmatpush1.msra.mxu0 %v187
    %659 = vmatprep.subr.mxu0 %v192
    %660 = vmatpush1.msra.mxu0 %v191
    %661 = vmatprep.subr.mxu0 %v196
    %662 = vmatpush1.msra.mxu0 %v195
    %663 = vmatprep.subr.mxu0 %v200
    %664 = vmatpush1.msra.mxu0 %v199
    %665 = vmatprep.subr.mxu0 %v204
    %666 = vmatpush1.msra.mxu0 %v203
    %667 = vmatprep.subr.mxu0 %v208
    %668 = vmatpush1.msra.mxu0 %v207
    %669 = vmatprep.subr.mxu0 %v212
    %670 = vmatpush1.msra.mxu0 %v211
    %671 = vmatprep.subr.mxu0 %v216
    %672 = vmatpush1.msra.mxu0 %v215
    %673 = vmatprep.subr.mxu0 %v220
    %674 = vmatpush1.msra.mxu0 %v219
    %675 = vmatprep.subr.mxu0 %v224
    %676 = vmatpush1.msra.mxu0 %v223
    %677 = vmatprep.subr.mxu0 %v228
    %678 = vmatpush1.msra.mxu0 %v227
    %679 = vmatprep.subr.mxu0 %v232
    %680 = vmatpush1.msra.mxu0 %v231
    %681 = vmatprep.subr.mxu0 %v236
    %682 = vmatpush1.msra.mxu0 %v235
    %683 = vmatprep.subr.mxu0 %v240
    %684 = vmatpush1.msra.mxu0 %v239
    %685 = vmatprep.subr.mxu0 %v244
    %686 = vmatpush1.msra.mxu0 %v243
    %687 = vmatprep.subr.mxu0 %v248
    %688 = vmatpush1.msra.mxu0 %v247
    %689 = vmatprep.subr.mxu0 %v252
    %690 = vmatpush1.msra.mxu0 %v251
    %691 = vmatprep.subr.mxu0 %v256
    %692 = vmatpush1.msra.mxu0 %v255
    %693 = vmatprep.subr.mxu0 %v260
    %694 = vmatpush1.msra.mxu0 %v259
    %695 = vmatprep.subr.mxu0 %v264
    %696 = vmatpush1.msra.mxu0 %v263
    %697 = vmatprep.subr.mxu0 %v268
    %698 = vmatpush1.msra.mxu0 %v267
    %699 = vmatprep.subr.mxu0 %v272
    %700 = vmatpush1.msra.mxu0 %v271
    %701 = vmatprep.subr.mxu0 %v276
    %702 = vmatpush1.msra.mxu0 %v275
    %703 = vmatprep.subr.mxu0 %v280
    %704 = vmatpush1.msra.mxu0 %v279
    %705 = vmatprep.subr.mxu0 %v284
    %706 = vmatpush1.msra.mxu0 %v283
    %707 = vmatprep.subr.mxu0 %v288
    %708 = vmatpush1.msra.mxu0 %v287
    %709 = vmatprep.subr.mxu0 %v292
    %710 = vmatpush1.msra.mxu0 %v291
    %711 = vmatprep.mubr.f32.mxu0 %v134
    %712 = vmatmul.mubr.f32.gmra.mrb[0].mxu0 %v133
    %v713 = vpop.f32.mrb[0].mxu0
    %v714 = vadd.f32 0.0, %v713
    %v715 = vpop.f32.mrb[0].mxu0
    %v716 = vadd.f32 0.0, %v715
    %717 = vmatprep.mubr.f32.mxu0 %v138
    %718 = vmatmul.mubr.f32.gmra.mrb[0].mxu0 %v137
    %v719 = vpop.f32.mrb[0].mxu0
    %v720 = vadd.f32 0.0, %v719
    %v721 = vpop.f32.mrb[0].mxu0
    %v722 = vadd.f32 0.0, %v721
    %723 = vmatprep.mubr.f32.mxu0 %v142
    %724 = vmatmul.mubr.f32.gmra.mrb[0].mxu0 %v141
    %v725 = vpop.f32.mrb[0].mxu0
    %v726 = vadd.f32 0.0, %v725
    %v727 = vpop.f32.mrb[0].mxu0
    %v728 = vadd.f32 0.0, %v727
    %729 = vmatprep.mubr.f32.mxu0 %v146
    %730 = vmatmul.mubr.f32.gmra.mrb[0].mxu0 %v145
    %v731 = vpop.f32.mrb[0].mxu0
    %v732 = vadd.f32 0.0, %v731
    %v733 = vpop.f32.mrb[0].mxu0
    %v734 = vadd.f32 0.0, %v733
    %735 = vmatprep.mubr.f32.mxu0 %v150
    %736 = vmatmul.mubr.f32.gmra.mrb[0].mxu0 %v149
    %v737 = vpop.f32.mrb[0].mxu0
    %v738 = vadd.f32 0.0, %v737
    %v739 = vpop.f32.mrb[0].mxu0
    %v740 = vadd.f32 0.0, %v739
    %741 = vmatprep.mubr.f32.mxu0 %v154
    %742 = vmatmul.mubr.f32.gmra.mrb[0].mxu0 %v153
    %v743 = vpop.f32.mrb[0].mxu0
    %v744 = vadd.f32 0.0, %v743
    %v745 = vpop.f32.mrb[0].mxu0
    %v746 = vadd.f32 0.0, %v745
    %747 = vmatprep.mubr.f32.mxu0 %v158
    %748 = vmatmul.mubr.f32.gmra.mrb[0].mxu0 %v157
    %v749 = vpop.f32.mrb[0].mxu0
    %v750 = vadd.f32 0.0, %v749
    %v751 = vpop.f32.mrb[0].mxu0
    %v752 = vadd.f32 0.0, %v751
    %753 = vmatprep.mubr.f32.mxu0 %v162
    %754 = vmatmul.mubr.f32.gmra.mrb[0].mxu0 %v161
    %v755 = vpop.f32.mrb[0].mxu0
    %v756 = vadd.f32 0.0, %v755
    %v757 = vpop.f32.mrb[0].mxu0
    %v758 = vadd.f32 0.0, %v757
    %759 = vdwg.mxu0
    %760 = vmatprep.subr.mxu0 %v296
    %761 = vmatpush1.msra.mxu0 %v295
    %762 = vmatprep.subr.mxu0 %v300
    %763 = vmatpush1.msra.mxu0 %v299
    %764 = vmatprep.subr.mxu0 %v304
    %765 = vmatpush1.msra.mxu0 %v303
    %766 = vmatprep.subr.mxu0 %v308
    %767 = vmatpush1.msra.mxu0 %v307
    %768 = vmatprep.subr.mxu0 %v312
    %769 = vmatpush1.msra.mxu0 %v311
    %770 = vmatprep.subr.mxu0 %v316
    %771 = vmatpush1.msra.mxu0 %v315
    %772 = vmatprep.subr.mxu0 %v320
    %773 = vmatpush1.msra.mxu0 %v319
    %774 = vmatprep.subr.mxu0 %v324
    %775 = vmatpush1.msra.mxu0 %v323
    %776 = vmatprep.subr.mxu0 %v328
    %777 = vmatpush1.msra.mxu0 %v327
    %778 = vmatprep.subr.mxu0 %v332
    %779 = vmatpush1.msra.mxu0 %v331
    %780 = vmatprep.subr.mxu0 %v336
    %781 = vmatpush1.msra.mxu0 %v335
    %782 = vmatprep.subr.mxu0 %v340
    %783 = vmatpush1.msra.mxu0 %v339
    %784 = vmatprep.subr.mxu0 %v344
    %785 = vmatpush1.msra.mxu0 %v343
    %786 = vmatprep.subr.mxu0 %v348
    %787 = vmatpush1.msra.mxu0 %v347
    %788 = vmatprep.subr.mxu0 %v352
    %789 = vmatpush1.msra.mxu0 %v351
    %790 = vmatprep.subr.mxu0 %v356
    %791 = vmatpush1.msra.mxu0 %v355
    %792 = vmatprep.subr.mxu0 %v360
    %793 = vmatpush1.msra.mxu0 %v359
    %794 = vmatprep.subr.mxu0 %v364
    %795 = vmatpush1.msra.mxu0 %v363
    %796 = vmatprep.subr.mxu0 %v368
    %797 = vmatpush1.msra.mxu0 %v367
    %798 = vmatprep.subr.mxu0 %v372
    %799 = vmatpush1.msra.mxu0 %v371
    %800 = vmatprep.subr.mxu0 %v376
    %801 = vmatpush1.msra.mxu0 %v375
    %802 = vmatprep.subr.mxu0 %v380
    %803 = vmatpush1.msra.mxu0 %v379
    %804 = vmatprep.subr.mxu0 %v384
    %805 = vmatpush1.msra.mxu0 %v383
    %806 = vmatprep.subr.mxu0 %v388
    %807 = vmatpush1.msra.mxu0 %v387
    %808 = vmatprep.subr.mxu0 %v392
    %809 = vmatpush1.msra.mxu0 %v391
    %810 = vmatprep.subr.mxu0 %v396
    %811 = vmatpush1.msra.mxu0 %v395
    %812 = vmatprep.subr.mxu0 %v400
    %813 = vmatpush1.msra.mxu0 %v399
    %814 = vmatprep.subr.mxu0 %v404
    %815 = vmatpush1.msra.mxu0 %v403
    %816 = vmatprep.subr.mxu0 %v408
    %817 = vmatpush1.msra.mxu0 %v407
    %818 = vmatprep.subr.mxu0 %v412
    %819 = vmatpush1.msra.mxu0 %v411
    %820 = vmatprep.subr.mxu0 %v416
    %821 = vmatpush1.msra.mxu0 %v415
    %822 = vmatprep.subr.mxu0 %v420
    %823 = vmatpush1.msra.mxu0 %v419
    %824 = vmatprep.mubr.f32.mxu0 %v136
    %825 = vmatmul.mubr.f32.gmra.mrb[0].mxu0 %v135
    %v826 = vpop.f32.mrb[0].mxu0
    %v827 = vadd.f32 %v714, %v826
    %v828 = vpop.f32.mrb[0].mxu0
    %v829 = vadd.f32 %v716, %v828
    %830 = vmatprep.mubr.f32.mxu0 %v140
    %831 = vmatmul.mubr.f32.gmra.mrb[0].mxu0 %v139
    %v832 = vpop.f32.mrb[0].mxu0
    %v833 = vadd.f32 %v720, %v832
    %v834 = vpop.f32.mrb[0].mxu0
    %v835 = vadd.f32 %v722, %v834
    %836 = vmatprep.mubr.f32.mxu0 %v144
    %837 = vmatmul.mubr.f32.gmra.mrb[0].mxu0 %v143
    %v838 = vpop.f32.mrb[0].mxu0
    %v839 = vadd.f32 %v726, %v838
    %v840 = vpop.f32.mrb[0].mxu0
    %v841 = vadd.f32 %v728, %v840
    %842 = vmatprep.mubr.f32.mxu0 %v148
    %843 = vmatmul.mubr.f32.gmra.mrb[0].mxu0 %v147
    %v844 = vpop.f32.mrb[0].mxu0
    %v845 = vadd.f32 %v732, %v844
    %v846 = vpop.f32.mrb[0].mxu0
    %v847 = vadd.f32 %v734, %v846
    %848 = vmatprep.mubr.f32.mxu0 %v152
    %849 = vmatmul.mubr.f32.gmra.mrb[0].mxu0 %v151
    %v850 = vpop.f32.mrb[0].mxu0
    %v851 = vadd.f32 %v738, %v850
    %v852 = vpop.f32.mrb[0].mxu0
    %v853 = vadd.f32 %v740, %v852
    %854 = vmatprep.mubr.f32.mxu0 %v156
    %855 = vmatmul.mubr.f32.gmra.mrb[0].mxu0 %v155
    %v856 = vpop.f32.mrb[0].mxu0
    %v857 = vadd.f32 %v744, %v856
    %v858 = vpop.f32.mrb[0].mxu0
    %v859 = vadd.f32 %v746, %v858
    %860 = vmatprep.mubr.f32.mxu0 %v160
    %861 = vmatmul.mubr.f32.gmra.mrb[0].mxu0 %v159
    %v862 = vpop.f32.mrb[0].mxu0
    %v863 = vadd.f32 %v750, %v862
    %v864 = vpop.f32.mrb[0].mxu0
    %v865 = vadd.f32 %v752, %v864
    %866 = vmatprep.mubr.f32.mxu0 %v164
    %867 = vmatmul.mubr.f32.gmra.mrb[0].mxu0 %v163
    %v868 = vpop.f32.mrb[0].mxu0
    %v869 = vadd.f32 %v756, %v868
    %v870 = vpop.f32.mrb[0].mxu0
    %v871 = vadd.f32 %v758, %v870
    %872 = vdwg.mxu0
    %v873 = vadd.f32 %v101, %v601
    %v874 = vadd.f32 %v102, %v603
    %v875 = vadd.f32 %v103, %v827
    %v876 = vadd.f32 %v104, %v829
    %v877 = vadd.f32 %v105, %v607
    %v878 = vadd.f32 %v106, %v609
    %v879 = vadd.f32 %v107, %v833
    %v880 = vadd.f32 %v108, %v835
    %v881 = vadd.f32 %v109, %v613
    %v882 = vadd.f32 %v110, %v615
    %v883 = vadd.f32 %v111, %v839
    %v884 = vadd.f32 %v112, %v841
    %v885 = vadd.f32 %v113, %v619
    %v886 = vadd.f32 %v114, %v621
    %v887 = vadd.f32 %v115, %v845
    %v888 = vadd.f32 %v116, %v847
    %v889 = vadd.f32 %v117, %v625
    %v890 = vadd.f32 %v118, %v627
    %v891 = vadd.f32 %v119, %v851
    %v892 = vadd.f32 %v120, %v853
    %v893 = vadd.f32 %v121, %v631
    %v894 = vadd.f32 %v122, %v633
    %v895 = vadd.f32 %v123, %v857
    %v896 = vadd.f32 %v124, %v859
    %v897 = vadd.f32 %v125, %v637
    %v898 = vadd.f32 %v126, %v639
    %v899 = vadd.f32 %v127, %v863
    %v900 = vadd.f32 %v128, %v865
    %v901 = vadd.f32 %v129, %v643
    %v902 = vadd.f32 %v130, %v645
    %v903 = vadd.f32 %v131, %v869
    %v904 = vadd.f32 %v132, %v871
    %905 = vst [vmem:[#allocation2] sm:$0xff] %v873
    %906 = vst [vmem:[#allocation2 + $0x8] sm:$0xff] %v874
    %907 = vst [vmem:[#allocation2 + $0x10] sm:$0xff] %v875
    %908 = vst [vmem:[#allocation2 + $0x18] sm:$0xff] %v876
    %909 = vst [vmem:[#allocation2 + $0x20] sm:$0xff] %v877
    %910 = vst [vmem:[#allocation2 + $0x28] sm:$0xff] %v878
    %911 = vst [vmem:[#allocation2 + $0x30] sm:$0xff] %v879
    %912 = vst [vmem:[#allocation2 + $0x38] sm:$0xff] %v880
    %913 = vst [vmem:[#allocation2 + $0x40] sm:$0xff] %v881
    %914 = vst [vmem:[#allocation2 + $0x48] sm:$0xff] %v882
    %915 = vst [vmem:[#allocation2 + $0x50] sm:$0xff] %v883
    %916 = vst [vmem:[#allocation2 + $0x58] sm:$0xff] %v884
    %917 = vst [vmem:[#allocation2 + $0x60] sm:$0xff] %v885
    %918 = vst [vmem:[#allocation2 + $0x68] sm:$0xff] %v886
    %919 = vst [vmem:[#allocation2 + $0x70] sm:$0xff] %v887
    %920 = vst [vmem:[#allocation2 + $0x78] sm:$0xff] %v888
    %921 = vst [vmem:[#allocation2 + $0x80] sm:$0xff] %v889
    %922 = vst [vmem:[#allocation2 + $0x88] sm:$0xff] %v890
    %923 = vst [vmem:[#allocation2 + $0x90] sm:$0xff] %v891
    %924 = vst [vmem:[#allocation2 + $0x98] sm:$0xff] %v892
    %925 = vst [vmem:[#allocation2 + $0xa0] sm:$0xff] %v893
    %926 = vst [vmem:[#allocation2 + $0xa8] sm:$0xff] %v894
    %927 = vst [vmem:[#allocation2 + $0xb0] sm:$0xff] %v895
    %928 = vst [vmem:[#allocation2 + $0xb8] sm:$0xff] %v896
    %929 = vst [vmem:[#allocation2 + $0xc0] sm:$0xff] %v897
    %930 = vst [vmem:[#allocation2 + $0xc8] sm:$0xff] %v898
    %931 = vst [vmem:[#allocation2 + $0xd0] sm:$0xff] %v899
    %932 = vst [vmem:[#allocation2 + $0xd8] sm:$0xff] %v900
    %933 = vst [vmem:[#allocation2 + $0xe0] sm:$0xff] %v901
    %934 = vst [vmem:[#allocation2 + $0xe8] sm:$0xff] %v902
    %935 = vst [vmem:[#allocation2 + $0xf0] sm:$0xff] %v903
    %936 = vst [vmem:[#allocation2 + $0xf8] sm:$0xff] %v904
    // Predicated region
    $region26: #{_linear_forward.1} parent=1 // pred_check
      %p937 = pneg %p43
    $region27: #{_linear_forward.1} parent=1 // pred_check_branch
      %939 = sbr.rel (%p937) target = $region29
    $region28: #{_linear_forward.1} parent=1 // pred_region
      %v940 = vld [vmem:[#allocation2] sm:$0xff]
      %v941 = vld [vmem:[#allocation2 + $0x8] sm:$0xff]
      %v942 = vld [vmem:[#allocation2 + $0x10] sm:$0xff]
      %v943 = vld [vmem:[#allocation2 + $0x18] sm:$0xff]
      %v944 = vld [vmem:[#allocation2 + $0x20] sm:$0xff]
      %v945 = vld [vmem:[#allocation2 + $0x28] sm:$0xff]
      %v946 = vld [vmem:[#allocation2 + $0x30] sm:$0xff]
      %v947 = vld [vmem:[#allocation2 + $0x38] sm:$0xff]
      %v948 = vld [vmem:[#allocation2 + $0x40] sm:$0xff]
      %v949 = vld [vmem:[#allocation2 + $0x48] sm:$0xff]
      %v950 = vld [vmem:[#allocation2 + $0x50] sm:$0xff]
      %v951 = vld [vmem:[#allocation2 + $0x58] sm:$0xff]
      %v952 = vld [vmem:[#allocation2 + $0x60] sm:$0xff]
      %v953 = vld [vmem:[#allocation2 + $0x68] sm:$0xff]
      %v954 = vld [vmem:[#allocation2 + $0x70] sm:$0xff]
      %v955 = vld [vmem:[#allocation2 + $0x78] sm:$0xff]
      %v956 = vld [vmem:[#allocation2 + $0x80] sm:$0xff]
      %v957 = vld [vmem:[#allocation2 + $0x88] sm:$0xff]
      %v958 = vld [vmem:[#allocation2 + $0x90] sm:$0xff]
      %v959 = vld [vmem:[#allocation2 + $0x98] sm:$0xff]
      %v960 = vld [vmem:[#allocation2 + $0xa0] sm:$0xff]
      %v961 = vld [vmem:[#allocation2 + $0xa8] sm:$0xff]
      %v962 = vld [vmem:[#allocation2 + $0xb0] sm:$0xff]
      %v963 = vld [vmem:[#allocation2 + $0xb8] sm:$0xff]
      %v964 = vld [vmem:[#allocation2 + $0xc0] sm:$0xff]
      %v965 = vld [vmem:[#allocation2 + $0xc8] sm:$0xff]
      %v966 = vld [vmem:[#allocation2 + $0xd0] sm:$0xff]
      %v967 = vld [vmem:[#allocation2 + $0xd8] sm:$0xff]
      %v968 = vld [vmem:[#allocation2 + $0xe0] sm:$0xff]
      %v969 = vld [vmem:[#allocation2 + $0xe8] sm:$0xff]
      %v970 = vld [vmem:[#allocation2 + $0xf0] sm:$0xff]
      %v971 = vld [vmem:[#allocation2 + $0xf8] sm:$0xff]
      %972 = vst [vmem:[#allocation8] sm:$0xff] %v940
      %973 = vst [vmem:[#allocation8 + $0x8] sm:$0xff] %v941
      %974 = vst [vmem:[#allocation8 + $0x10] sm:$0xff] %v942
      %975 = vst [vmem:[#allocation8 + $0x18] sm:$0xff] %v943
      %976 = vst [vmem:[#allocation8 + $0x20] sm:$0xff] %v944
      %977 = vst [vmem:[#allocation8 + $0x28] sm:$0xff] %v945
      %978 = vst [vmem:[#allocation8 + $0x30] sm:$0xff] %v946
      %979 = vst [vmem:[#allocation8 + $0x38] sm:$0xff] %v947
      %980 = vst [vmem:[#allocation8 + $0x40] sm:$0xff] %v948
      %981 = vst [vmem:[#allocation8 + $0x48] sm:$0xff] %v949
      %982 = vst [vmem:[#allocation8 + $0x50] sm:$0xff] %v950
      %983 = vst [vmem:[#allocation8 + $0x58] sm:$0xff] %v951
      %984 = vst [vmem:[#allocation8 + $0x60] sm:$0xff] %v952
      %985 = vst [vmem:[#allocation8 + $0x68] sm:$0xff] %v953
      %986 = vst [vmem:[#allocation8 + $0x70] sm:$0xff] %v954
      %987 = vst [vmem:[#allocation8 + $0x78] sm:$0xff] %v955
      %988 = vst [vmem:[#allocation8 + $0x80] sm:$0xff] %v956
      %989 = vst [vmem:[#allocation8 + $0x88] sm:$0xff] %v957
      %990 = vst [vmem:[#allocation8 + $0x90] sm:$0xff] %v958
      %991 = vst [vmem:[#allocation8 + $0x98] sm:$0xff] %v959
      %992 = vst [vmem:[#allocation8 + $0xa0] sm:$0xff] %v960
      %993 = vst [vmem:[#allocation8 + $0xa8] sm:$0xff] %v961
      %994 = vst [vmem:[#allocation8 + $0xb0] sm:$0xff] %v962
      %995 = vst [vmem:[#allocation8 + $0xb8] sm:$0xff] %v963
      %996 = vst [vmem:[#allocation8 + $0xc0] sm:$0xff] %v964
      %997 = vst [vmem:[#allocation8 + $0xc8] sm:$0xff] %v965
      %998 = vst [vmem:[#allocation8 + $0xd0] sm:$0xff] %v966
      %999 = vst [vmem:[#allocation8 + $0xd8] sm:$0xff] %v967
      %1000 = vst [vmem:[#allocation8 + $0xe0] sm:$0xff] %v968
      %1001 = vst [vmem:[#allocation8 + $0xe8] sm:$0xff] %v969
      %1002 = vst [vmem:[#allocation8 + $0xf0] sm:$0xff] %v970
      %1003 = vst [vmem:[#allocation8 + $0xf8] sm:$0xff] %v971
    $region29: #{_linear_forward.1} parent=1 // pred_fallthru
      _
    // Predicated region
    $region30: #{_linear_forward.1} parent=1 // pred_check
      _
    $region31: #{_linear_forward.1} parent=1 // pred_check_branch
      %1005 = sbr.rel (0) target = $region33
    $region32: #{_linear_forward.1} parent=1 // pred_region
      %s1007 = ssub.s32 4096, 4096
      %1008 = vsyncadd [#allocation5], %s1007
      %s1009 = sshll.u32 [#allocation8], 4
      %s1010 = int_to_ptr.vmem [resolvable:$true] %s1009
      %1015 = dma.vmem_to_hbm [thread:$0]  %s1010, 4096, %s3, [#allocation5], 512, 512, 32
    $region33: #{_linear_forward.1} parent=1 // pred_fallthru
      _
    // Predicated region
    $region34: #{_linear_forward.1} parent=1 // pred_check
      _
    $region35: #{_linear_forward.1} parent=1 // pred_check_branch
      %1017 = sbr.rel (0) target = $region37
    $region36: #{_linear_forward.1} parent=1 // pred_region
      %1018 = dma.done [#allocation5], 4096
    $region37: #{_linear_forward.1} parent=1 // pred_fallthru
      _
    %1019 = vsyncpa [#allocation4], 1
    %1020 = vsyncpa [#allocation7], 1
    %1021 = vsyncpa [#allocation5], 1

</llo_original>
